<compile_context>
chip_gen: v7x
topology: tpu7x:2x2x1
jax: 0.10.0
libtpu: 0.0.40
codegen_flags: <defaults>
</compile_context>

<pallas_src>
import functools

import jax
import jax.numpy as jnp
from jax.experimental import pallas as pl
from jax.experimental.pallas import tpu as pltpu


def _pick_f_tile(f_pad, batch):
    """Largest multiple of 128 (<=512) dividing f_pad; shrink if it leaves <2 parallel tiles."""
    cands = [c for c in (512, 384, 256, 128) if c <= f_pad and f_pad % c == 0]
    f_tile = cands[0]
    if batch * (f_pad // f_tile) < 2:          # keep both v7x TensorCores busy if possible
        for c in cands:
            if batch * (f_pad // c) >= 2:
                f_tile = c
                break
    return f_tile


def _sigmoid_hist_kernel(x_ref, o_ref, acc_ref, *, num_bins, half_sigma, delta, vmin,
                         inv_n, n_valid, n_tile, mask_n):
    # x_ref:   (1, n_tile, f_tile)      slab of examples, features on lanes
    # o_ref:   (1, num_bins, f_tile)    per-(bag, F-tile) histogram block (lane-dense)
    # acc_ref: (num_bins+1, f_tile)     per-EDGE tanh sums, persistent across the N axis
    n_idx = pl.program_id(2)

    @pl.when(n_idx == 0)
    def _init():
        acc_ref[...] = jnp.zeros_like(acc_ref)

    x = x_ref[0]                               # (n_tile, f_tile) float32
    hx = x * half_sigma                        # fold sigma/2 into x once per tile

    if mask_n:
        rows = (jax.lax.broadcasted_iota(jnp.int32, (n_tile, 1), 0) + n_idx * n_tile)
        valid = rows < n_valid                 # (n_tile, 1); where() is NaN-safe for pad rows

    for j in range(num_bins + 1):              # static unroll over the shared bin edges
        edge = vmin + delta * j                # python float, folded at trace time
        th = jnp.tanh(hx - half_sigma * edge)  # EUP tanh; saturates cleanly, no clamps
        if mask_n:
            th = jnp.where(valid, th, 0.0)
        # sum over examples (sublanes) on the VPU; accumulate directly into edge row j
        acc_ref[pl.ds(j, 1), :] += jnp.sum(th, axis=0, keepdims=True)

    @pl.when(n_idx == pl.num_programs(2) - 1)
    def _finalize():
        t = acc_ref[...]                                   # (num_bins+1, f_tile)
        hist = (t[:num_bins, :] - t[1:, :]) * (0.5 * inv_n)  # sigmoid diff from tanh sums
        o_ref[0] = hist.astype(o_ref.dtype)                # lane-dense (num_bins, f_tile)


def sigmoid_histogram(x, *, num_bins, vmin, vmax, sigma, quantiles=False):
    """Pallas implementation of SigmoidHistogram.forward.

    x: (N, F) or (B, N, F).  Returns (B, F * num_bins) float32, feature-major bins.
    """
    if quantiles:
        # TODO(synk): reference's quantiles=True branch reads `input.view(-1, num_bins)`
        # (shape-dependent / likely buggy upstream) — not implemented here.
        raise NotImplementedError("quantiles=True not supported")

    if x.ndim == 2:
        x = x[None, ...]
    x = x.astype(jnp.float32)
    B, N, F = x.shape

    delta = float(vmax - vmin) / float(num_bins)
    half_sigma = 0.5 * float(sigma)

    # Features on lanes: zero-pad to a multiple of 128 (padded columns sliced off below).
    f_pad = max(128, -(-F // 128) * 128)
    # Examples on sublanes: zero-pad to a multiple of 8 (padded rows masked in-kernel).
    n_pad = -(-N // 8) * 8
    if f_pad != F or n_pad != N:
        x = jnp.pad(x, ((0, 0), (0, n_pad - N), (0, f_pad - F)))

    f_tile = _pick_f_tile(f_pad, B)
    n_tile = min(n_pad, 1024)                 # big tiles amortize ~0.35us/step overhead,
    grid_n = pl.cdiv(n_pad, n_tile)           # footprint stays ~4 MiB << 64 MiB (v7x VMEM)
    mask_n = (grid_n * n_tile != N)           # mask pad rows / the straddling last tile

    kernel = functools.partial(
        _sigmoid_hist_kernel,
        num_bins=int(num_bins), half_sigma=half_sigma, delta=delta, vmin=float(vmin),
        inv_n=1.0 / float(N), n_valid=N, n_tile=n_tile, mask_n=mask_n)

    out = pl.pallas_call(
        kernel,
        out_shape=jax.ShapeDtypeStruct((B, num_bins, f_pad), jnp.float32),
        grid_spec=pltpu.PrefetchScalarGridSpec(
            num_scalar_prefetch=0,
            grid=(B, f_pad // f_tile, grid_n),
            in_specs=[pl.BlockSpec((1, n_tile, f_tile), lambda b, f, n: (b, n, f))],
            out_specs=pl.BlockSpec((1, num_bins, f_tile), lambda b, f, n: (b, 0, f)),
            scratch_shapes=[pltpu.VMEM((num_bins + 1, f_tile), jnp.float32)],
        ),
        compiler_params=pltpu.CompilerParams(
            dimension_semantics=("parallel", "parallel", "arbitrary"),
            vmem_limit_bytes=32 * 1024 * 1024,
        ),
    )(x)

    # Tiny (B, NB, F) output: wrapper-side layout plumbing to the feature-major flatten.
    out = out[:, :, :F]
    return jnp.transpose(out, (0, 2, 1)).reshape(B, F * num_bins)


def _reference(x, *, num_bins, vmin, vmax, sigma):
    """Pure-JAX f32 reference mirroring the PyTorch loop."""
    if x.ndim == 2:
        x = x[None, ...]
    x = x.astype(jnp.float32)
    B, N, F = x.shape
    delta = float(vmax - vmin) / float(num_bins)
    centers = float(vmin) + delta * (jnp.arange(num_bins, dtype=jnp.float32) + 0.5)
    d = x[:, :, :, None] - centers                                   # (B, N, F, NB)
    s = jax.nn.sigmoid(sigma * (d + delta / 2)) - jax.nn.sigmoid(sigma * (d - delta / 2))
    hist = s.sum(axis=1) / N                                         # (B, F, NB)
    return hist.reshape(B, F * num_bins)


if __name__ == "__main__":
    # Small config matching the module's expected use (bags of examples x features).
    key = jax.random.PRNGKey(0)
    k1, k2 = jax.random.split(key)
    B, N, F = 2, 16, 8
    NUM_BINS = 8
    VMIN, VMAX, SIGMA = 0.0, 1.0, 100.0
    x = jax.random.uniform(k1, (B, N, F), dtype=jnp.float32, minval=0.0, maxval=1.0)

    out = sigmoid_histogram(x, num_bins=NUM_BINS, vmin=VMIN, vmax=VMAX, sigma=SIGMA)
    out = jax.block_until_ready(out)
    ref = _reference(x, num_bins=NUM_BINS, vmin=VMIN, vmax=VMAX, sigma=SIGMA)
    assert out.shape == (B, F * NUM_BINS), out.shape
    err = float(jnp.max(jnp.abs(out - ref)))
    assert jnp.allclose(out, ref, atol=1e-3, rtol=1e-3), err

    # Ragged config exercising multiple N tiles, the masked last tile and F padding.
    x2 = jax.random.normal(k2, (2, 1500, 200), dtype=jnp.float32)
    out2 = sigmoid_histogram(x2, num_bins=6, vmin=-3.0, vmax=3.0, sigma=25.0)
    out2 = jax.block_until_ready(out2)
    ref2 = _reference(x2, num_bins=6, vmin=-3.0, vmax=3.0, sigma=25.0)
    assert out2.shape == (2, 200 * 6), out2.shape
    err2 = float(jnp.max(jnp.abs(out2 - ref2)))
    assert jnp.allclose(out2, ref2, atol=1e-3, rtol=1e-3), err2

    print("KERNEL_OK")
</pallas_src>

<mosaic_0001>
module attributes {stable_mosaic.version = 11 : i64} {
  func.func @_sigmoid_hist_kernel(%arg0: i32, %arg1: i32, %arg2: i32, %arg3: memref<1x16x128xf32, #tpu.memory_space<vmem>>, %arg4: memref<1x8x128xf32, #tpu.memory_space<vmem>>, %arg5: memref<9x128xf32, #tpu.memory_space<vmem>>) attributes {dimension_semantics = [#tpu.dimension_semantics<parallel>, #tpu.dimension_semantics<parallel>, #tpu.dimension_semantics<arbitrary>], iteration_bounds = array<i64: 2, 1, 1>, scalar_prefetch = 0 : i64, scratch_operands = 1 : i64, tpu.core_type = #tpu.core_type<tc>, window_params = [{transform_indices = @transform_0, window_bounds = array<i64: 1, 16, 128>}, {transform_indices = @transform_1, window_bounds = array<i64: 1, 8, 128>}]} {
    %c0_i32 = arith.constant 0 : i32
    %0 = arith.cmpi eq, %arg2, %c0_i32 : i32
    %1 = arith.extui %0 : i1 to i32
    %c0_i32_0 = arith.constant 0 : i32
    %2 = arith.cmpi ne, %1, %c0_i32_0 : i32
    scf.if %2 {
      %cst_51 = arith.constant 0.000000e+00 : f32
      %82 = vector.broadcast %cst_51 : f32 to vector<9x128xf32>
      %c0_52 = arith.constant 0 : index
      %c0_53 = arith.constant 0 : index
      %83 = vector.load %arg5[%c0_52, %c0_53] : memref<9x128xf32, #tpu.memory_space<vmem>>, vector<9x128xf32>
      tpu.vector_store %arg5[%c0_52, %c0_53], %82 {strides = array<i32>} : memref<9x128xf32, #tpu.memory_space<vmem>>, vector<9x128xf32>,
    } else {
    }
    %c0 = arith.constant 0 : index
    %c0_1 = arith.constant 0 : index
    %c0_2 = arith.constant 0 : index
    %3 = vector.load %arg3[%c0, %c0_1, %c0_2] : memref<1x16x128xf32, #tpu.memory_space<vmem>>, vector<1x16x128xf32>
    %4 = vector.shape_cast %3 : vector<1x16x128xf32> to vector<16x128xf32>
    %cst = arith.constant 5.000000e+01 : f32
    %5 = vector.broadcast %cst : f32 to vector<16x128xf32>
    %6 = arith.mulf %4, %5 : vector<16x128xf32>
    %cst_3 = arith.constant 0.000000e+00 : f32
    %7 = vector.broadcast %cst_3 : f32 to vector<16x128xf32>
    %8 = arith.subf %6, %7 : vector<16x128xf32>
    %9 = math.tanh %8 : vector<16x128xf32>
    %c0_4 = arith.constant 0 : index
    %c0_5 = arith.constant 0 : index
    %10 = vector.load %arg5[%c0_4, %c0_5] : memref<9x128xf32, #tpu.memory_space<vmem>>, vector<1x128xf32>
    %cst_6 = arith.constant dense<0.000000e+00> : vector<128xf32>
    %11 = vector.multi_reduction <add>, %9, %cst_6 [0] : vector<16x128xf32> to vector<128xf32>
    %12 = vector.shape_cast %11 : vector<128xf32> to vector<1x128xf32>
    %13 = arith.addf %10, %12 : vector<1x128xf32>
    %c0_7 = arith.constant 0 : index
    %c0_8 = arith.constant 0 : index
    %14 = vector.load %arg5[%c0_7, %c0_8] : memref<9x128xf32, #tpu.memory_space<vmem>>, vector<1x128xf32>
    tpu.vector_store %arg5[%c0_7, %c0_8], %13 {strides = array<i32>} : memref<9x128xf32, #tpu.memory_space<vmem>>, vector<1x128xf32>,
    %cst_9 = arith.constant 6.250000e+00 : f32
    %15 = vector.broadcast %cst_9 : f32 to vector<16x128xf32>
    %16 = arith.subf %6, %15 : vector<16x128xf32>
    %17 = math.tanh %16 : vector<16x128xf32>
    %c1 = arith.constant 1 : index
    %c0_10 = arith.constant 0 : index
    %18 = vector.load %arg5[%c1, %c0_10] : memref<9x128xf32, #tpu.memory_space<vmem>>, vector<1x128xf32>
    %cst_11 = arith.constant dense<0.000000e+00> : vector<128xf32>
    %19 = vector.multi_reduction <add>, %17, %cst_11 [0] : vector<16x128xf32> to vector<128xf32>
    %20 = vector.shape_cast %19 : vector<128xf32> to vector<1x128xf32>
    %21 = arith.addf %18, %20 : vector<1x128xf32>
    %c1_12 = arith.constant 1 : index
    %c0_13 = arith.constant 0 : index
    %22 = vector.load %arg5[%c1_12, %c0_13] : memref<9x128xf32, #tpu.memory_space<vmem>>, vector<1x128xf32>
    tpu.vector_store %arg5[%c1_12, %c0_13], %21 {strides = array<i32>} : memref<9x128xf32, #tpu.memory_space<vmem>>, vector<1x128xf32>,
    %cst_14 = arith.constant 1.250000e+01 : f32
    %23 = vector.broadcast %cst_14 : f32 to vector<16x128xf32>
    %24 = arith.subf %6, %23 : vector<16x128xf32>
    %25 = math.tanh %24 : vector<16x128xf32>
    %c2 = arith.constant 2 : index
    %c0_15 = arith.constant 0 : index
    %26 = vector.load %arg5[%c2, %c0_15] : memref<9x128xf32, #tpu.memory_space<vmem>>, vector<1x128xf32>
    %cst_16 = arith.constant dense<0.000000e+00> : vector<128xf32>
    %27 = vector.multi_reduction <add>, %25, %cst_16 [0] : vector<16x128xf32> to vector<128xf32>
    %28 = vector.shape_cast %27 : vector<128xf32> to vector<1x128xf32>
    %29 = arith.addf %26, %28 : vector<1x128xf32>
    %c2_17 = arith.constant 2 : index
    %c0_18 = arith.constant 0 : index
    %30 = vector.load %arg5[%c2_17, %c0_18] : memref<9x128xf32, #tpu.memory_space<vmem>>, vector<1x128xf32>
    tpu.vector_store %arg5[%c2_17, %c0_18], %29 {strides = array<i32>} : memref<9x128xf32, #tpu.memory_space<vmem>>, vector<1x128xf32>,
    %cst_19 = arith.constant 1.875000e+01 : f32
    %31 = vector.broadcast %cst_19 : f32 to vector<16x128xf32>
    %32 = arith.subf %6, %31 : vector<16x128xf32>
    %33 = math.tanh %32 : vector<16x128xf32>
    %c3 = arith.constant 3 : index
    %c0_20 = arith.constant 0 : index
    %34 = vector.load %arg5[%c3, %c0_20] : memref<9x128xf32, #tpu.memory_space<vmem>>, vector<1x128xf32>
    %cst_21 = arith.constant dense<0.000000e+00> : vector<128xf32>
    %35 = vector.multi_reduction <add>, %33, %cst_21 [0] : vector<16x128xf32> to vector<128xf32>
    %36 = vector.shape_cast %35 : vector<128xf32> to vector<1x128xf32>
    %37 = arith.addf %34, %36 : vector<1x128xf32>
    %c3_22 = arith.constant 3 : index
    %c0_23 = arith.constant 0 : index
    %38 = vector.load %arg5[%c3_22, %c0_23] : memref<9x128xf32, #tpu.memory_space<vmem>>, vector<1x128xf32>
    tpu.vector_store %arg5[%c3_22, %c0_23], %37 {strides = array<i32>} : memref<9x128xf32, #tpu.memory_space<vmem>>, vector<1x128xf32>,
    %cst_24 = arith.constant 2.500000e+01 : f32
    %39 = vector.broadcast %cst_24 : f32 to vector<16x128xf32>
    %40 = arith.subf %6, %39 : vector<16x128xf32>
    %41 = math.tanh %40 : vector<16x128xf32>
    %c4 = arith.constant 4 : index
    %c0_25 = arith.constant 0 : index
    %42 = vector.load %arg5[%c4, %c0_25] : memref<9x128xf32, #tpu.memory_space<vmem>>, vector<1x128xf32>
    %cst_26 = arith.constant dense<0.000000e+00> : vector<128xf32>
    %43 = vector.multi_reduction <add>, %41, %cst_26 [0] : vector<16x128xf32> to vector<128xf32>
    %44 = vector.shape_cast %43 : vector<128xf32> to vector<1x128xf32>
    %45 = arith.addf %42, %44 : vector<1x128xf32>
    %c4_27 = arith.constant 4 : index
    %c0_28 = arith.constant 0 : index
    %46 = vector.load %arg5[%c4_27, %c0_28] : memref<9x128xf32, #tpu.memory_space<vmem>>, vector<1x128xf32>
    tpu.vector_store %arg5[%c4_27, %c0_28], %45 {strides = array<i32>} : memref<9x128xf32, #tpu.memory_space<vmem>>, vector<1x128xf32>,
    %cst_29 = arith.constant 3.125000e+01 : f32
    %47 = vector.broadcast %cst_29 : f32 to vector<16x128xf32>
    %48 = arith.subf %6, %47 : vector<16x128xf32>
    %49 = math.tanh %48 : vector<16x128xf32>
    %c5 = arith.constant 5 : index
    %c0_30 = arith.constant 0 : index
    %50 = vector.load %arg5[%c5, %c0_30] : memref<9x128xf32, #tpu.memory_space<vmem>>, vector<1x128xf32>
    %cst_31 = arith.constant dense<0.000000e+00> : vector<128xf32>
    %51 = vector.multi_reduction <add>, %49, %cst_31 [0] : vector<16x128xf32> to vector<128xf32>
    %52 = vector.shape_cast %51 : vector<128xf32> to vector<1x128xf32>
    %53 = arith.addf %50, %52 : vector<1x128xf32>
    %c5_32 = arith.constant 5 : index
    %c0_33 = arith.constant 0 : index
    %54 = vector.load %arg5[%c5_32, %c0_33] : memref<9x128xf32, #tpu.memory_space<vmem>>, vector<1x128xf32>
    tpu.vector_store %arg5[%c5_32, %c0_33], %53 {strides = array<i32>} : memref<9x128xf32, #tpu.memory_space<vmem>>, vector<1x128xf32>,
    %cst_34 = arith.constant 3.750000e+01 : f32
    %55 = vector.broadcast %cst_34 : f32 to vector<16x128xf32>
    %56 = arith.subf %6, %55 : vector<16x128xf32>
    %57 = math.tanh %56 : vector<16x128xf32>
    %c6 = arith.constant 6 : index
    %c0_35 = arith.constant 0 : index
    %58 = vector.load %arg5[%c6, %c0_35] : memref<9x128xf32, #tpu.memory_space<vmem>>, vector<1x128xf32>
    %cst_36 = arith.constant dense<0.000000e+00> : vector<128xf32>
    %59 = vector.multi_reduction <add>, %57, %cst_36 [0] : vector<16x128xf32> to vector<128xf32>
    %60 = vector.shape_cast %59 : vector<128xf32> to vector<1x128xf32>
    %61 = arith.addf %58, %60 : vector<1x128xf32>
    %c6_37 = arith.constant 6 : index
    %c0_38 = arith.constant 0 : index
    %62 = vector.load %arg5[%c6_37, %c0_38] : memref<9x128xf32, #tpu.memory_space<vmem>>, vector<1x128xf32>
    tpu.vector_store %arg5[%c6_37, %c0_38], %61 {strides = array<i32>} : memref<9x128xf32, #tpu.memory_space<vmem>>, vector<1x128xf32>,
    %cst_39 = arith.constant 4.375000e+01 : f32
    %63 = vector.broadcast %cst_39 : f32 to vector<16x128xf32>
    %64 = arith.subf %6, %63 : vector<16x128xf32>
    %65 = math.tanh %64 : vector<16x128xf32>
    %c7 = arith.constant 7 : index
    %c0_40 = arith.constant 0 : index
    %66 = vector.load %arg5[%c7, %c0_40] : memref<9x128xf32, #tpu.memory_space<vmem>>, vector<1x128xf32>
    %cst_41 = arith.constant dense<0.000000e+00> : vector<128xf32>
    %67 = vector.multi_reduction <add>, %65, %cst_41 [0] : vector<16x128xf32> to vector<128xf32>
    %68 = vector.shape_cast %67 : vector<128xf32> to vector<1x128xf32>
    %69 = arith.addf %66, %68 : vector<1x128xf32>
    %c7_42 = arith.constant 7 : index
    %c0_43 = arith.constant 0 : index
    %70 = vector.load %arg5[%c7_42, %c0_43] : memref<9x128xf32, #tpu.memory_space<vmem>>, vector<1x128xf32>
    tpu.vector_store %arg5[%c7_42, %c0_43], %69 {strides = array<i32>} : memref<9x128xf32, #tpu.memory_space<vmem>>, vector<1x128xf32>,
    %cst_44 = arith.constant 5.000000e+01 : f32
    %71 = vector.broadcast %cst_44 : f32 to vector<16x128xf32>
    %72 = arith.subf %6, %71 : vector<16x128xf32>
    %73 = math.tanh %72 : vector<16x128xf32>
    %c8 = arith.constant 8 : index
    %c0_45 = arith.constant 0 : index
    %74 = vector.load %arg5[%c8, %c0_45] : memref<9x128xf32, #tpu.memory_space<vmem>>, vector<1x128xf32>
    %cst_46 = arith.constant dense<0.000000e+00> : vector<128xf32>
    %75 = vector.multi_reduction <add>, %73, %cst_46 [0] : vector<16x128xf32> to vector<128xf32>
    %76 = vector.shape_cast %75 : vector<128xf32> to vector<1x128xf32>
    %77 = arith.addf %74, %76 : vector<1x128xf32>
    %c8_47 = arith.constant 8 : index
    %c0_48 = arith.constant 0 : index
    %78 = vector.load %arg5[%c8_47, %c0_48] : memref<9x128xf32, #tpu.memory_space<vmem>>, vector<1x128xf32>
    tpu.vector_store %arg5[%c8_47, %c0_48], %77 {strides = array<i32>} : memref<9x128xf32, #tpu.memory_space<vmem>>, vector<1x128xf32>,
    %c0_i32_49 = arith.constant 0 : i32
    %79 = arith.cmpi eq, %arg2, %c0_i32_49 : i32
    %80 = arith.extui %79 : i1 to i32
    %c0_i32_50 = arith.constant 0 : i32
    %81 = arith.cmpi ne, %80, %c0_i32_50 : i32
    scf.if %81 {
      %c0_51 = arith.constant 0 : index
      %c0_52 = arith.constant 0 : index
      %82 = vector.load %arg5[%c0_51, %c0_52] : memref<9x128xf32, #tpu.memory_space<vmem>>, vector<9x128xf32>
      %83 = vector.extract_strided_slice %82 {offsets = [0, 0], sizes = [8, 128], strides = [1, 1]} : vector<9x128xf32> to vector<8x128xf32>
      %84 = vector.extract_strided_slice %82 {offsets = [1, 0], sizes = [8, 128], strides = [1, 1]} : vector<9x128xf32> to vector<8x128xf32>
      %85 = arith.subf %83, %84 : vector<8x128xf32>
      %cst_53 = arith.constant 3.125000e-02 : f32
      %86 = vector.broadcast %cst_53 : f32 to vector<8x128xf32>
      %87 = arith.mulf %85, %86 : vector<8x128xf32>
      %c0_54 = arith.constant 0 : index
      %c0_55 = arith.constant 0 : index
      %c0_56 = arith.constant 0 : index
      %88 = vector.load %arg4[%c0_54, %c0_55, %c0_56] : memref<1x8x128xf32, #tpu.memory_space<vmem>>, vector<1x8x128xf32>
      %89 = vector.shape_cast %88 : vector<1x8x128xf32> to vector<8x128xf32>
      %90 = vector.shape_cast %87 : vector<8x128xf32> to vector<1x8x128xf32>
      tpu.vector_store %arg4[%c0_54, %c0_55, %c0_56], %90 {strides = array<i32>} : memref<1x8x128xf32, #tpu.memory_space<vmem>>, vector<1x8x128xf32>,
    } else {
    }
    return
  }
  func.func @transform_0(%arg0: i32, %arg1: i32, %arg2: i32) -> (i32, i32, i32) {
    %c0_i32 = arith.constant 0 : i32
    return %arg0, %arg2, %arg1 : i32, i32, i32
  }
  func.func @transform_1(%arg0: i32, %arg1: i32, %arg2: i32) -> (i32, i32, i32) {
    %c0_i32 = arith.constant 0 : i32
    %c0_i32_0 = arith.constant 0 : i32
    return %arg0, %c0_i32, %arg1 : i32, i32, i32
  }
}

</mosaic_0001>

<llo_original>
// kernel: tpu_custom_call.1
$region0: #{tpu_custom_call.1}
  #allocation0 [shape = 'u32[]', space=smem, size = 0x4, offset = 0x4, fixed_abs, tag = 'smem constant byte address 0x4 - core index']
  #allocation1 [shape = 'u32[144,128]{1,0:T(1,128)}', space=vmem, size = 0x12000, scoped, tag = 'internal scratch']
  #allocation2 [shape = 'f32[9,128]{1,0:T(8,128)}', space=vmem, size = 0x2000, scoped, tag = 'scratch operand']
  %s0 = inlined_call_operand.hbm [shape: f32[2,16,128], index: 0, kind: input, shape index: {}]
  %s1 = inlined_call_operand.hbm [shape: f32[2,8,128], index: 1, kind: output, shape index: {}]
  %s2 = sld [smem:[#allocation0]]
  $region49: #{tpu_custom_call.1} parent=0
    _
  %s4 = ssub.s32 1, %s2
  %s5 = scalar_select 0, %s4, %s2
  $region1: #{tpu_custom_call.1} parent=0
    #allocation3 [shape = 'u8[16384]{0}', space=vmem, size = 0x4000, scoped, tag = 'input window, operand 0']
    #allocation4 [shape = 's32[2]{0}', space=sflag, size = 0x8, scoped, tag = 'scoped memory for tpu_custom_call.1']
    #allocation5 [shape = 's32[2]{0}', space=sflag, size = 0x8, scoped, tag = 'scoped memory for tpu_custom_call.1']
    #allocation6 [shape = 'u8[8192]{0}', space=vmem, size = 0x2000, scoped, tag = 'output window, operand 0']
    %6 = vsyncpa [#allocation4], 0
    %s7 = scalar_lea.sflag [#allocation4], 1
    %8 = vsyncpa %s7, 0
    %9 = vsyncpa [#allocation5], 0
    %s10 = scalar_lea.sflag [#allocation5], 1
    %11 = vsyncpa %s10, 0
    loop: start=0, step=1, limit=4
    $region2: #{tpu_custom_call.1} parent=1 // loop_pre_header
      _
    $region3: #{tpu_custom_call.1} parent=1 // loop_header
      %s13 = sphi 0, %s17
      %p14 = scmp.ge.s32.totalorder %s13, 4
      %s20 = sphi 0, %s39
      %s21 = sphi 0, %s35
      %s22 = sphi 0, %s31
      %s23 = sphi 0, %s20
      %s24 = sphi 0, %s21
      %s25 = sphi 0, %s22
      %s26 = sphi 0, %s23
      %s27 = sphi 0, %s24
      %s28 = sphi 0, %s25
      %s46 = sphi 0, %s48
      %s49 = sphi 0, %s46
      %s50 = sphi 0, %s49
      %s66 = sphi 0, %s50
      %s74 = sphi 0, %s76
      %s77 = sphi 0, %s74
      %s78 = sphi 0, %s77
      %s94 = sphi 0, %s78
    $region4: #{tpu_custom_call.1} parent=1 // loop_header_branch
      %16 = sbr.rel (%p14) target = $region8
    $region5: #{tpu_custom_call.1} parent=1 // loop_body
      %s18 = ssub.s32 %s13, 1
      %s19 = ssub.s32 %s13, 2
      %s29 = sadd.s32 1, %s22
      %p30 = scmp.ge.s32.totalorder %s29, 1
      %s31 = scalar_select %p30, 0, %s29
      %s32 = sadd.s32 1, %s21
      %s33 = scalar_select %p30, %s32, %s21
      %p34 = scmp.ge.s32.totalorder %s33, 1
      %s35 = scalar_select %p34, 0, %s33
      %s36 = sadd.s32 1, %s20
      %s37 = scalar_select %p34, %s36, %s20
      %p38 = scmp.ge.s32.totalorder %s37, 2
      %s39 = scalar_select %p38, 0, %s37
      %s40 = ssub.s32 %s20, %s39
      %s41 = ssub.s32 %s22, %s31
      %s42 = sor.u32 %s40, %s41
      %s43 = ssub.s32 %s21, %s35
      %s44 = sor.u32 %s42, %s43
      %p45 = scmp.eq.s32.totalorder %s44, 0
      %s47 = sadd.s32 %s46, 1
      %s48 = scalar_select %p45, %s46, %s47
      %p51 = pneg %p45
      %p52 = scmp.eq.s32.totalorder %s13, 1
      %p53 = por %p51, %p52
      %p54 = scmp.ne.s32.totalorder %s46, %s49
      %p55 = scmp.eq.s32.totalorder %s13, 0
      %p56 = por %p54, %p55
      %p57 = scmp.ne.s32.totalorder %s46, %s49
      %p58 = scmp.eq.s32.totalorder %s18, 1
      %p59 = por %p57, %p58
      %p60 = scmp.ne.s32.totalorder %s49, %s50
      %p61 = scmp.eq.s32.totalorder %s18, 0
      %p62 = por %p60, %p61
      %p63 = scmp.ne.s32.totalorder %s49, %s50
      %p64 = scmp.eq.s32.totalorder %s19, 1
      %p65 = por %p63, %p64
      %p67 = scmp.ne.s32.totalorder %s50, %s66
      %p68 = scmp.eq.s32.totalorder %s19, 0
      %p69 = por %p67, %p68
      %s70 = ssub.s32 %s20, %s39
      %s71 = ssub.s32 %s21, %s35
      %s72 = sor.u32 %s70, %s71
      %p73 = scmp.eq.s32.totalorder %s72, 0
      %s75 = sadd.s32 %s74, 1
      %s76 = scalar_select %p73, %s74, %s75
      %p79 = pneg %p73
      %p80 = scmp.eq.s32.totalorder %s13, 1
      %p81 = por %p79, %p80
      %p82 = scmp.ne.s32.totalorder %s74, %s77
      %p83 = scmp.eq.s32.totalorder %s13, 0
      %p84 = por %p82, %p83
      %p85 = scmp.ne.s32.totalorder %s74, %s77
      %p86 = scmp.eq.s32.totalorder %s18, 1
      %p87 = por %p85, %p86
      %p88 = scmp.ne.s32.totalorder %s77, %s78
      %p89 = scmp.eq.s32.totalorder %s18, 0
      %p90 = por %p88, %p89
      %p91 = scmp.ne.s32.totalorder %s77, %s78
      %p92 = scmp.eq.s32.totalorder %s19, 1
      %p93 = por %p91, %p92
      %p95 = scmp.ne.s32.totalorder %s78, %s94
      %p96 = scmp.eq.s32.totalorder %s19, 0
      %p97 = por %p95, %p96
      %p98 = scmp.le.s32.totalorder 1, %s13
      %p99 = scmp.lt.s32.totalorder %s13, 3
      %p100 = pnand %p98, %p99
      %p101 = pneg %p100
      // Predicated region
      $region9: #{tpu_custom_call.1} parent=5 // pred_check
        _
      $region10: #{tpu_custom_call.1} parent=5 // pred_check_branch
        %103 = sbr.rel (%p100) target = $region12
      $region11: #{tpu_custom_call.1} parent=5 // pred_region
        %s104 = ssub.s32 %s13, 1
      $region12: #{tpu_custom_call.1} parent=5 // pred_fallthru
        _
      %p105 = scmp.lt.s32.totalorder %s13, 2
      // Predicated region
      $region13: #{tpu_custom_call.1} parent=5 // pred_check
        %p106 = pneg %p105
      $region14: #{tpu_custom_call.1} parent=5 // pred_check_branch
        %108 = sbr.rel (%p106) target = $region16
      $region15: #{tpu_custom_call.1} parent=5 // pred_region
        // Predicated region
        $region17: #{tpu_custom_call.1} parent=15 // pred_check
          %p109 = pneg %p56
        $region18: #{tpu_custom_call.1} parent=15 // pred_check_branch
          %111 = sbr.rel (%p109) target = $region20
        $region19: #{tpu_custom_call.1} parent=15 // pred_region
          %s112 = sand.u32 %s46, 1
          %s113 = scalar_lea.sflag [#allocation4], %s112
          %s114 = sand.u32 %s46, 1
          %s115 = smul.addr %s114, 16
          %s116 = scalar_lea.vmem [#allocation3], %s115
          %s117 = smul.u32 2, %s22
          %s119 = ssub.s32 256, 256
          %120 = vsyncadd %s113, %s119
          %s121 = sadd.s32 %s21, %s117
          %s122 = smul.addr %s20, 2
          %s123 = sadd.s32 %s121, %s122
          %s124 = smul.addr %s123, 128
          %s125 = scalar_lea.hbm %s0, %s124
          %s126 = sshll.u32 %s116, 4
          %s127 = int_to_ptr.vmem [resolvable:$true] %s126
          %132 = dma.hbm_to_vmem [thread:$0]  %s125, 256, %s127, %s113, 128, 128, 8
        $region20: #{tpu_custom_call.1} parent=15 // pred_fallthru
          _
      $region16: #{tpu_custom_call.1} parent=5 // pred_fallthru
        _
      %p133 = scmp.le.s32.totalorder 1, %s13
      %p134 = scmp.lt.s32.totalorder %s13, 3
      %p135 = pnand %p133, %p134
      %p136 = pneg %p135
      // Predicated region
      $region21: #{tpu_custom_call.1} parent=5 // pred_check
        _
      $region22: #{tpu_custom_call.1} parent=5 // pred_check_branch
        %138 = sbr.rel (%p135) target = $region24
      $region23: #{tpu_custom_call.1} parent=5 // pred_region
        %s139 = ssub.s32 %s13, 1
        %s140 = sand.u32 %s49, 1
        %s141 = scalar_lea.sflag [#allocation4], %s140
        %s142 = sand.u32 %s49, 1
        %s143 = smul.addr %s142, 16
        %s144 = scalar_lea.vmem [#allocation3], %s143
        // Predicated region
        $region25: #{tpu_custom_call.1} parent=23 // pred_check
          %p145 = pneg %p62
        $region26: #{tpu_custom_call.1} parent=23 // pred_check_branch
          %147 = sbr.rel (%p145) target = $region28
        $region27: #{tpu_custom_call.1} parent=23 // pred_region
          %148 = dma.done %s141, 256
        $region28: #{tpu_custom_call.1} parent=23 // pred_fallthru
          _
        %s149 = sand.u32 %s49, 1
        %s150 = scalar_lea.sflag [#allocation4], %s149
        %s151 = sand.u32 %s49, 1
        %s152 = smul.addr %s151, 16
        %s153 = scalar_lea.vmem [#allocation3], %s152
        %p154 = pneg %p62
        %p155 = pneg %p59
        %p156 = pneg %p90
        %p157 = pneg %p87
        %s158 = sand.u32 %s77, 1
        %s159 = scalar_lea.sflag [#allocation5], %s158
        %s160 = sand.u32 %s77, 1
        %s161 = smul.addr %s160, 8
        %s162 = scalar_lea.vmem [#allocation6], %s161
        %s163 = smul.u32 2, %s25
        %p164 = scmp.eq.s32.totalorder %s25, 0
        // Predicated region
        $region29: #{tpu_custom_call.1} parent=23 // pred_check
          %p165 = pneg %p164
        $region30: #{tpu_custom_call.1} parent=23 // pred_check_branch
          %167 = sbr.rel (%p165) target = $region32
        $region31: #{tpu_custom_call.1} parent=23 // pred_region
          %168 = vst [vmem:[#allocation2] sm:$0xff] 0.0
          %169 = vst [vmem:[#allocation2 + $0x8] sm:$0x1] 0.0
        $region32: #{tpu_custom_call.1} parent=23 // pred_fallthru
          _
        %v170 = vld [vmem:[%s144] sm:$0xff]
        %v171 = vld [vmem:[%s144 + $0x8] sm:$0xff]
        %v172 = vmul.f32 %v170, 50.0
        %v173 = vmul.f32 %v171, 50.0
        %v174 = vtanh.pop %v172
        %v175 = vtanh.pop %v173
        %v176 = vld [vmem:[#allocation2] sm:$0x1]
        %v177 = vadd.f32 %v174, %v175
        %v178 = vrot.slane %v177, 4
        %v179 = vadd.f32 %v177, %v178
        %v180 = vrot.slane %v179, 2
        %v181 = vadd.f32 %v179, %v180
        %v182 = vrot.slane %v181, 1
        %v183 = vadd.f32 %v181, %v182
        %v184 = vadd.f32 %v176, %v183
        %185 = vst [vmem:[#allocation2] sm:$0x1] %v184
        %v186 = vsub.f32 %v172, 6.25
        %v187 = vsub.f32 %v173, 6.25
        %v188 = vtanh.pop %v186
        %v189 = vtanh.pop %v187
        %v190 = vld [vmem:[#allocation2 + $0x1] sm:$0x1]
        %v191 = vadd.f32 %v188, %v189
        %v192 = vrot.slane %v191, 4
        %v193 = vadd.f32 %v191, %v192
        %v194 = vrot.slane %v193, 2
        %v195 = vadd.f32 %v193, %v194
        %v196 = vrot.slane %v195, 1
        %v197 = vadd.f32 %v195, %v196
        %v198 = vadd.f32 %v190, %v197
        %199 = vst [vmem:[#allocation2 + $0x1] sm:$0x1] %v198
        %v200 = vsub.f32 %v172, 12.5
        %v201 = vsub.f32 %v173, 12.5
        %v202 = vtanh.pop %v200
        %v203 = vtanh.pop %v201
        %v204 = vld [vmem:[#allocation2 + $0x2] sm:$0x1]
        %v205 = vadd.f32 %v202, %v203
        %v206 = vrot.slane %v205, 4
        %v207 = vadd.f32 %v205, %v206
        %v208 = vrot.slane %v207, 2
        %v209 = vadd.f32 %v207, %v208
        %v210 = vrot.slane %v209, 1
        %v211 = vadd.f32 %v209, %v210
        %v212 = vadd.f32 %v204, %v211
        %213 = vst [vmem:[#allocation2 + $0x2] sm:$0x1] %v212
        %v214 = vsub.f32 %v172, 18.75
        %v215 = vsub.f32 %v173, 18.75
        %v216 = vtanh.pop %v214
        %v217 = vtanh.pop %v215
        %v218 = vld [vmem:[#allocation2 + $0x3] sm:$0x1]
        %v219 = vadd.f32 %v216, %v217
        %v220 = vrot.slane %v219, 4
        %v221 = vadd.f32 %v219, %v220
        %v222 = vrot.slane %v221, 2
        %v223 = vadd.f32 %v221, %v222
        %v224 = vrot.slane %v223, 1
        %v225 = vadd.f32 %v223, %v224
        %v226 = vadd.f32 %v218, %v225
        %227 = vst [vmem:[#allocation2 + $0x3] sm:$0x1] %v226
        %v228 = vsub.f32 %v172, 25.0
        %v229 = vsub.f32 %v173, 25.0
        %v230 = vtanh.pop %v228
        %v231 = vtanh.pop %v229
        %v232 = vld [vmem:[#allocation2 + $0x4] sm:$0x1]
        %v233 = vadd.f32 %v230, %v231
        %v234 = vrot.slane %v233, 4
        %v235 = vadd.f32 %v233, %v234
        %v236 = vrot.slane %v235, 2
        %v237 = vadd.f32 %v235, %v236
        %v238 = vrot.slane %v237, 1
        %v239 = vadd.f32 %v237, %v238
        %v240 = vadd.f32 %v232, %v239
        %241 = vst [vmem:[#allocation2 + $0x4] sm:$0x1] %v240
        %v242 = vsub.f32 %v172, 31.25
        %v243 = vsub.f32 %v173, 31.25
        %v244 = vtanh.pop %v242
        %v245 = vtanh.pop %v243
        %v246 = vld [vmem:[#allocation2 + $0x5] sm:$0x1]
        %v247 = vadd.f32 %v244, %v245
        %v248 = vrot.slane %v247, 4
        %v249 = vadd.f32 %v247, %v248
        %v250 = vrot.slane %v249, 2
        %v251 = vadd.f32 %v249, %v250
        %v252 = vrot.slane %v251, 1
        %v253 = vadd.f32 %v251, %v252
        %v254 = vadd.f32 %v246, %v253
        %255 = vst [vmem:[#allocation2 + $0x5] sm:$0x1] %v254
        %v256 = vsub.f32 %v172, 37.5
        %v257 = vsub.f32 %v173, 37.5
        %v258 = vtanh.pop %v256
        %v259 = vtanh.pop %v257
        %v260 = vld [vmem:[#allocation2 + $0x6] sm:$0x1]
        %v261 = vadd.f32 %v258, %v259
        %v262 = vrot.slane %v261, 4
        %v263 = vadd.f32 %v261, %v262
        %v264 = vrot.slane %v263, 2
        %v265 = vadd.f32 %v263, %v264
        %v266 = vrot.slane %v265, 1
        %v267 = vadd.f32 %v265, %v266
        %v268 = vadd.f32 %v260, %v267
        %269 = vst [vmem:[#allocation2 + $0x6] sm:$0x1] %v268
        %v270 = vsub.f32 %v172, 43.75
        %v271 = vsub.f32 %v173, 43.75
        %v272 = vtanh.pop %v270
        %v273 = vtanh.pop %v271
        %v274 = vld [vmem:[#allocation2 + $0x7] sm:$0x1]
        %v275 = vadd.f32 %v272, %v273
        %v276 = vrot.slane %v275, 4
        %v277 = vadd.f32 %v275, %v276
        %v278 = vrot.slane %v277, 2
        %v279 = vadd.f32 %v277, %v278
        %v280 = vrot.slane %v279, 1
        %v281 = vadd.f32 %v279, %v280
        %v282 = vadd.f32 %v274, %v281
        %283 = vst [vmem:[#allocation2 + $0x7] sm:$0x1] %v282
        %v284 = vsub.f32 %v172, 50.0
        %v285 = vsub.f32 %v173, 50.0
        %v286 = vtanh.pop %v284
        %v287 = vtanh.pop %v285
        %v288 = vld [vmem:[#allocation2 + $0x8] sm:$0x1]
        %v289 = vadd.f32 %v286, %v287
        %v290 = vrot.slane %v289, 4
        %v291 = vadd.f32 %v289, %v290
        %v292 = vrot.slane %v291, 2
        %v293 = vadd.f32 %v291, %v292
        %v294 = vrot.slane %v293, 1
        %v295 = vadd.f32 %v293, %v294
        %v296 = vadd.f32 %v288, %v295
        %297 = vst [vmem:[#allocation2 + $0x8] sm:$0x1] %v296
        // Predicated region
        $region33: #{tpu_custom_call.1} parent=23 // pred_check
          %p298 = pneg %p164
        $region34: #{tpu_custom_call.1} parent=23 // pred_check_branch
          %300 = sbr.rel (%p298) target = $region36
        $region35: #{tpu_custom_call.1} parent=23 // pred_region
          %v301 = vld [vmem:[#allocation2] sm:$0xff]
          %v302 = vld [vmem:[#allocation2 + $0x8] sm:$0x1]
          %vm305 = vcmask 1046528
          %v306 = vrot.slane %v301, 1
          %v307 = vrot.slane %v302, 1
          %v308 = vsel %vm305, %v306, %v307
          %v310 = vsub.f32 %v301, %v308
          %v311 = vmul.f32 %v310, 0.03125
          %312 = vst [vmem:[%s162] sm:$0xff] %v311
        $region36: #{tpu_custom_call.1} parent=23 // pred_fallthru
          _
        %s313 = sand.u32 %s77, 1
        %s314 = scalar_lea.sflag [#allocation5], %s313
        %s315 = sand.u32 %s77, 1
        %s316 = smul.addr %s315, 8
        %s317 = scalar_lea.vmem [#allocation6], %s316
        // Predicated region
        $region37: #{tpu_custom_call.1} parent=23 // pred_check
          %p318 = pneg %p87
        $region38: #{tpu_custom_call.1} parent=23 // pred_check_branch
          %320 = sbr.rel (%p318) target = $region40
        $region39: #{tpu_custom_call.1} parent=23 // pred_region
          %s322 = ssub.s32 128, 128
          %323 = vsyncadd %s314, %s322
          %s324 = sadd.s32 %s24, %s23
          %s325 = smul.addr %s324, 128
          %s326 = scalar_lea.hbm %s1, %s325
          %s328 = sshll.u32 %s317, 4
          %s329 = int_to_ptr.vmem [resolvable:$true] %s328
          %331 = dma.vmem_to_hbm [thread:$0]  %s329, 128, %s326, %s314
        $region40: #{tpu_custom_call.1} parent=23 // pred_fallthru
          _
      $region24: #{tpu_custom_call.1} parent=5 // pred_fallthru
        _
      %p332 = scmp.le.s32.totalorder 2, %s13
      // Predicated region
      $region41: #{tpu_custom_call.1} parent=5 // pred_check
        %p333 = pneg %p332
      $region42: #{tpu_custom_call.1} parent=5 // pred_check_branch
        %335 = sbr.rel (%p333) target = $region44
      $region43: #{tpu_custom_call.1} parent=5 // pred_region
        %s336 = ssub.s32 %s13, 2
        // Predicated region
        $region45: #{tpu_custom_call.1} parent=43 // pred_check
          %p337 = pneg %p93
        $region46: #{tpu_custom_call.1} parent=43 // pred_check_branch
          %339 = sbr.rel (%p337) target = $region48
        $region47: #{tpu_custom_call.1} parent=43 // pred_region
          %s340 = sand.u32 %s78, 1
          %s341 = scalar_lea.sflag [#allocation5], %s340
          %s342 = sand.u32 %s78, 1
          %s343 = smul.addr %s342, 8
          %s344 = scalar_lea.vmem [#allocation6], %s343
          %345 = dma.done %s341, 128
        $region48: #{tpu_custom_call.1} parent=43 // pred_fallthru
          _
      $region44: #{tpu_custom_call.1} parent=5 // pred_fallthru
        _
    $region6: #{tpu_custom_call.1} parent=1 // loop_footer
      %s17 = sadd.s32 1, %s13
    $region7: #{tpu_custom_call.1} parent=1 // loop_footer_branch
      %12 = sbr.rel target = $region3
    $region8: #{tpu_custom_call.1} parent=1 // loop_exit
      _
    %346 = vsyncpa [#allocation4], 1
    %s347 = scalar_lea.sflag [#allocation4], 1
    %348 = vsyncpa %s347, 1
    %349 = vsyncpa [#allocation5], 1
    %s350 = scalar_lea.sflag [#allocation5], 1
    %351 = vsyncpa %s350, 1

</llo_original>
